<compile_context>
chip_gen: v7x
topology: tpu7x:2x2x1
jax: 0.10.0
libtpu: 0.0.40
codegen_flags: <defaults>
</compile_context>

<pallas_src>
import functools

import jax
import jax.numpy as jnp
from jax.experimental import pallas as pl
from jax.experimental.pallas import tpu as pltpu

_LANE = 128
_MIB = 1024 * 1024
# Widest-first lane-dense column candidates (all multiples of 128 so stores
# are unmasked full-lane vst).
_COL_CANDIDATES = (4096, 2048, 1024, 512, 256, 128)


def _squashed_tanh_kernel(x_ref, o_ref, *, compute_dtype):
    # compute_dtype is f32 everywhere except native-bf16 chips with bf16 input
    # (v6e/v7x), where staying in bf16 halves vreg pressure and EUP pushes.
    x = x_ref[...].astype(compute_dtype)
    o_ref[...] = ((jnp.tanh(x) + 1.0) * 0.5).astype(o_ref.dtype)


def _sublane_pack(dtype) -> int:
    # Sublane packing multiple: f32 -> 8, bf16 -> 16, int8/fp8 -> 32.
    itemsize = jnp.dtype(dtype).itemsize
    return max(8, 8 * (4 // max(1, itemsize)))


def _round_up(a: int, b: int) -> int:
    return ((a + b - 1) // b) * b


def _chip_config():
    """Trace-time chip probe -> (target_block_bytes, num_tensorcores, bf16_native)."""
    block_bytes, num_tc, bf16_native = 2 * _MIB, 1, False
    try:
        kind = jax.devices()[0].device_kind.lower()
    except Exception:  # pragma: no cover - conservative fallback
        return block_bytes, num_tc, bf16_native
    if "v7" in kind:
        # Faster HBM per TC: bigger blocks keep per-step overhead <10%; two
        # TensorCores share the 1-D grid via dimension_semantics.
        block_bytes, num_tc, bf16_native = 4 * _MIB, 2, True
    elif "v6" in kind:
        bf16_native = True
    elif "v5p" in kind or "v4" in kind:
        num_tc = 2  # megacore chips; keep f32 compute path.
    return block_bytes, num_tc, bf16_native


def _pick_block_rows(rows, cols, dtype, target_block_bytes, num_tc):
    """Block-row count: ~target bytes per block, sublane-packed, megacore-aware."""
    pack = _sublane_pack(dtype)
    itemsize = jnp.dtype(dtype).itemsize
    target_rows = max(pack, ((target_block_bytes // itemsize) // cols) // pack * pack)
    br = rows if rows <= target_rows else target_rows
    if num_tc >= 2 and rows >= 2 * pack:
        steps = pl.cdiv(rows, br)
        if steps < 8 and steps % 2 != 0:
            # Small odd step count leaves one TensorCore idle for ~1 block;
            # split so the count comes out even (or close) and both cores eat.
            desired = steps + 1
            br = max(pack, _round_up(pl.cdiv(rows, desired), pack))
    return br


def _run_tiled(x2d, dtype, block_bytes, num_tc, compute_dtype, donate_input):
    """Run the elementwise kernel over a (rows, cols) lane-dense slab."""
    rows, cols = x2d.shape
    itemsize = jnp.dtype(dtype).itemsize
    br = _pick_block_rows(rows, cols, dtype, block_bytes, num_tc)
    grid = (pl.cdiv(rows, br),)  # ragged final block handled by masked stores

    n_eff = rows * cols
    cost = pl.CostEstimate(
        flops=2 * n_eff,            # add + scale
        transcendentals=n_eff,      # one tanh per element
        bytes_accessed=2 * n_eff * itemsize,
    )
    # >= all generations' scoped-VMEM defaults; scales with block size so the
    # 4 live pipeline buffers + f32 intermediates of narrow-dtype blocks fit.
    vmem_limit = int(min(48 * _MIB, max(32 * _MIB, 8 * block_bytes)))

    kernel = functools.partial(_squashed_tanh_kernel, compute_dtype=compute_dtype)
    # NOTE: aliasing is a memory-footprint feature only (caller must donate x
    # at the jit boundary); it does not reduce the kernel's HBM traffic.
    extra = {"input_output_aliases": {0: 0}} if donate_input else {}
    return pl.pallas_call(
        kernel,
        out_shape=jax.ShapeDtypeStruct((rows, cols), dtype),
        grid_spec=pltpu.PrefetchScalarGridSpec(
            num_scalar_prefetch=0,
            grid=grid,
            in_specs=[pl.BlockSpec((br, cols), lambda i: (i, 0))],
            out_specs=pl.BlockSpec((br, cols), lambda i: (i, 0)),
        ),
        compiler_params=pltpu.CompilerParams(
            dimension_semantics=("parallel",),
            vmem_limit_bytes=vmem_limit,
        ),
        cost_estimate=cost,
        **extra,
    )(x2d)


def squashed_tanh(
    x: jax.Array,
    *,
    target_block_bytes: int | None = None,
    min_pallas_elems: int = 65536,
    donate_input: bool = False,
) -> jax.Array:
    """Apply f(x) = 0.5*(tanh(x)+1) elementwise via a Pallas TPU kernel."""
    orig_shape = x.shape
    dtype = x.dtype
    n = x.size

    # Tiny tensors: pallas_call launch/DMA overhead dominates; let XLA's fused
    # elementwise handle it.
    if n == 0 or n < min_pallas_elems:
        return (0.5 * (jnp.tanh(x.astype(jnp.float32)) + 1.0)).astype(dtype)

    block_bytes, num_tc, bf16_native = _chip_config()
    if target_block_bytes is not None:
        block_bytes = target_block_bytes
    compute_dtype = (
        jnp.bfloat16
        if (bf16_native and jnp.dtype(dtype) == jnp.dtype(jnp.bfloat16))
        else jnp.float32
    )

    flat = x.reshape(-1)

    if n % _LANE == 0:
        # Hot path: zero-copy reshape to the widest lane-dense slab whose
        # column count divides n. No pad, no trailing slice -> the kernel's
        # own HBM read+write is the only traffic.
        cols = next(c for c in _COL_CANDIDATES if n % c == 0)
        out2d = _run_tiled(
            flat.reshape(n // cols, cols), dtype, block_bytes, num_tc,
            compute_dtype, donate_input,
        )
        return out2d.reshape(orig_shape)

    # Truly ragged element count (rare for NCHW): pad to a full tile, run, slice.
    # TODO(synk): replace pad/slice with a scalar-prefetched n + in-kernel
    # masked tail store so this branch matches the hot path's HBM traffic.
    tile = 8 * _LANE
    padded = _round_up(n, tile)
    flat = jnp.pad(flat, (0, padded - n))
    cols = next(c for c in _COL_CANDIDATES if padded % c == 0)
    out2d = _run_tiled(
        flat.reshape(padded // cols, cols), dtype, block_bytes, num_tc,
        compute_dtype, donate_input=False,
    )
    return out2d.reshape(-1)[:n].reshape(orig_shape)


if __name__ == "__main__":
    key = jax.random.PRNGKey(0)
    k1, k2, k3, k4 = jax.random.split(key, 4)

    def ref(v):
        return (0.5 * (jnp.tanh(v.astype(jnp.float32)) + 1.0)).astype(v.dtype)

    # Small NCHW input (2048 elems): force the Pallas path so the kernel runs.
    x1 = jax.random.normal(k1, (2, 4, 16, 16), dtype=jnp.float32)
    y1 = squashed_tanh(x1, min_pallas_elems=0)
    jax.block_until_ready(y1)
    assert y1.shape == x1.shape and y1.dtype == x1.dtype
    assert jnp.allclose(y1, ref(x1), atol=1e-5, rtol=1e-5)

    # Larger divisible input: exercises the wide-block path above the default
    # tiny-input fallback threshold (and the megacore split on multi-TC chips).
    x2 = jax.random.normal(k2, (4, 16, 32, 32), dtype=jnp.float32)
    y2 = squashed_tanh(x2)
    jax.block_until_ready(y2)
    assert jnp.allclose(y2, ref(x2), atol=1e-5, rtol=1e-5)

    # n % 128 == 0 but n % 1024 != 0: exercises the widened zero-copy path
    # with narrower (but still full-lane) columns.
    x3 = jax.random.normal(k3, (2, 3, 8, 16), dtype=jnp.float32)
    y3 = squashed_tanh(x3, min_pallas_elems=0)
    jax.block_until_ready(y3)
    assert jnp.allclose(y3, ref(x3), atol=1e-5, rtol=1e-5)

    # Truly ragged element count: exercises the (rare) pad-and-slice path.
    x4 = jax.random.normal(k4, (3, 5, 7, 11), dtype=jnp.float32)
    y4 = squashed_tanh(x4, min_pallas_elems=0)
    jax.block_until_ready(y4)
    assert jnp.allclose(y4, ref(x4), atol=1e-5, rtol=1e-5)

    print("KERNEL_OK")
</pallas_src>

<mosaic_0001>
module attributes {stable_mosaic.version = 11 : i64} {
  func.func @_squashed_tanh_kernel(%arg0: i32, %arg1: memref<1x2048xf32, #tpu.memory_space<vmem>>, %arg2: memref<1x2048xf32, #tpu.memory_space<vmem>>) attributes {dimension_semantics = [#tpu.dimension_semantics<parallel>], iteration_bounds = array<i64: 1>, scalar_prefetch = 0 : i64, scratch_operands = 0 : i64, tpu.core_type = #tpu.core_type<tc>, window_params = [{transform_indices = @transform_0, window_bounds = array<i64: 1, 2048>}, {transform_indices = @transform_1, window_bounds = array<i64: 1, 2048>}]} {
    %c0 = arith.constant 0 : index
    %c0_0 = arith.constant 0 : index
    %0 = vector.load %arg1[%c0, %c0_0] : memref<1x2048xf32, #tpu.memory_space<vmem>>, vector<1x2048xf32>
    %1 = math.tanh %0 : vector<1x2048xf32>
    %cst = arith.constant 1.000000e+00 : f32
    %2 = vector.broadcast %cst : f32 to vector<1x2048xf32>
    %3 = arith.addf %1, %2 : vector<1x2048xf32>
    %cst_1 = arith.constant 5.000000e-01 : f32
    %4 = vector.broadcast %cst_1 : f32 to vector<1x2048xf32>
    %5 = arith.mulf %3, %4 : vector<1x2048xf32>
    %c0_2 = arith.constant 0 : index
    %c0_3 = arith.constant 0 : index
    %6 = vector.load %arg2[%c0_2, %c0_3] : memref<1x2048xf32, #tpu.memory_space<vmem>>, vector<1x2048xf32>
    tpu.vector_store %arg2[%c0_2, %c0_3], %5 {strides = array<i32>} : memref<1x2048xf32, #tpu.memory_space<vmem>>, vector<1x2048xf32>,
    return
  }
  func.func @transform_0(%arg0: i32) -> (i32, i32) {
    %c0_i32 = arith.constant 0 : i32
    %c0_i32_0 = arith.constant 0 : i32
    return %arg0, %c0_i32 : i32, i32
  }
  func.func @transform_1(%arg0: i32) -> (i32, i32) {
    %c0_i32 = arith.constant 0 : i32
    %c0_i32_0 = arith.constant 0 : i32
    return %arg0, %c0_i32 : i32, i32
  }
}

</mosaic_0001>

<llo_original>
// kernel: tpu_custom_call.1
$region0: #{tpu_custom_call.1}
  #allocation0 [shape = 'u32[]', space=smem, size = 0x4, offset = 0x4, fixed_abs, tag = 'smem constant byte address 0x4 - core index']
  #allocation1 [shape = 'u32[144,128]{1,0:T(1,128)}', space=vmem, size = 0x12000, scoped, tag = 'internal scratch']
  %s0 = inlined_call_operand.hbm [shape: f32[1,2048], index: 0, kind: input, shape index: {}]
  %s1 = inlined_call_operand.hbm [shape: f32[1,2048], index: 1, kind: output, shape index: {}]
  %s2 = sld [smem:[#allocation0]]
  $region18: #{tpu_custom_call.1} parent=0
    _
  %s4 = ssub.s32 1, %s2
  %s5 = scalar_select 0, %s4, %s2
  $region1: #{tpu_custom_call.1} parent=0
    #allocation2 [shape = 'u8[8192]{0}', space=vmem, size = 0x2000, scoped, tag = 'input window, operand 0, single buffered']
    #allocation3 [shape = 's32[1]{0}', space=sflag, size = 0x4, scoped, tag = 'scoped memory for tpu_custom_call.1']
    #allocation4 [shape = 's32[1]{0}', space=sflag, size = 0x4, scoped, tag = 'scoped memory for tpu_custom_call.1']
    #allocation5 [shape = 'u8[8192]{0}', space=vmem, size = 0x2000, scoped, tag = 'output window, operand 0, single buffered']
    %6 = vsyncpa [#allocation3], 0
    %7 = vsyncpa [#allocation4], 0
    // Predicated region
    $region2: #{tpu_custom_call.1} parent=1 // pred_check
      _
    $region3: #{tpu_custom_call.1} parent=1 // pred_check_branch
      %9 = sbr.rel (0) target = $region5
    $region4: #{tpu_custom_call.1} parent=1 // pred_region
      %s11 = ssub.s32 256, 256
      %12 = vsyncadd [#allocation3], %s11
      %s14 = sshll.u32 [#allocation2], 4
      %s15 = int_to_ptr.vmem [resolvable:$true] %s14
      %17 = dma.hbm_to_vmem [thread:$0]  %s0, 256, %s15, [#allocation3]
    $region5: #{tpu_custom_call.1} parent=1 // pred_fallthru
      _
    // Predicated region
    $region6: #{tpu_custom_call.1} parent=1 // pred_check
      _
    $region7: #{tpu_custom_call.1} parent=1 // pred_check_branch
      %19 = sbr.rel (0) target = $region9
    $region8: #{tpu_custom_call.1} parent=1 // pred_region
      %20 = dma.done [#allocation3], 256
    $region9: #{tpu_custom_call.1} parent=1 // pred_fallthru
      _
    %v21 = vld [vmem:[#allocation2] sm:$0xff]
    %v22 = vld [vmem:[#allocation2 + $0x8] sm:$0xff]
    %v23 = vtanh.pop %v21
    %v24 = vtanh.pop %v22
    %v25 = vadd.f32 %v23, 1.0
    %v26 = vadd.f32 %v24, 1.0
    %v27 = vmul.f32 %v25, 0.5
    %v28 = vmul.f32 %v26, 0.5
    %29 = vst [vmem:[#allocation5] sm:$0xff] %v27
    %30 = vst [vmem:[#allocation5 + $0x8] sm:$0xff] %v28
    // Predicated region
    $region10: #{tpu_custom_call.1} parent=1 // pred_check
      _
    $region11: #{tpu_custom_call.1} parent=1 // pred_check_branch
      %32 = sbr.rel (0) target = $region13
    $region12: #{tpu_custom_call.1} parent=1 // pred_region
      %s34 = ssub.s32 256, 256
      %35 = vsyncadd [#allocation4], %s34
      %s37 = sshll.u32 [#allocation5], 4
      %s38 = int_to_ptr.vmem [resolvable:$true] %s37
      %40 = dma.vmem_to_hbm [thread:$0]  %s38, 256, %s1, [#allocation4]
    $region13: #{tpu_custom_call.1} parent=1 // pred_fallthru
      _
    // Predicated region
    $region14: #{tpu_custom_call.1} parent=1 // pred_check
      _
    $region15: #{tpu_custom_call.1} parent=1 // pred_check_branch
      %42 = sbr.rel (0) target = $region17
    $region16: #{tpu_custom_call.1} parent=1 // pred_region
      %43 = dma.done [#allocation4], 256
    $region17: #{tpu_custom_call.1} parent=1 // pred_fallthru
      _
    %44 = vsyncpa [#allocation3], 1
    %45 = vsyncpa [#allocation4], 1

</llo_original>
